<compile_context>
chip_gen: v5e
topology: v5e:2x2
jax: 0.10.0
libtpu: 0.0.40
codegen_flags: <defaults>
</compile_context>

<pallas_src>
import functools

import jax
import jax.numpy as jnp
from jax import lax
from jax.experimental import pallas as pl
from jax.experimental.pallas import tpu as pltpu


# ---------------------------------------------------------------------------
# helpers
# ---------------------------------------------------------------------------
def _round_up(v, m):
    return ((v + m - 1) // m) * m


def _pick_spatial_tile(s, target=1024):
    """Largest tile dividing s, preferring multiples of 256, then 128, else full."""
    for unit in (256, 128):
        if s % unit == 0:
            t = min(s, _round_up(target, unit))
            while s % t:
                t -= unit
            return t
    return s


def _vmem_limit(block_bytes):
    # double-buffered blocks + headroom, capped well under v7x's 64 MiB VMEM.
    return int(min(48 * 2**20, max(8 * 2**20, 2 * block_bytes + 4 * 2**20)))


# ---------------------------------------------------------------------------
# Pallas kernels
# ---------------------------------------------------------------------------
def _down_kernel(p_ref, w_ref, o_ref):
    """Conv2d(k4,s2,p1) tile as (inner_pad, K1) @ (K1, ts) bf16 matmul -> ReLU.

    Lane axis = spatial positions of one sample (lane-dense store, bf16 out).
    """
    h = jnp.dot(w_ref[...], p_ref[0], preferred_element_type=jnp.float32)
    o_ref[0] = jnp.maximum(h, 0.0).astype(o_ref.dtype)


def _up_kernel(y3p_ref, w2_ref, mask_ref, y4_ref, st_ref, *, wp, l_keep):
    """ConvTranspose2d(k4,s2,p1) as 4 parity 2x2 convs + partial BN stats.

    y3p_ref : (1, inner_pad, Lp) bf16  -- padded, flattened y3 of one sample
    w2_ref  : (4, 4, outer, inner_pad) bf16  -- [parity, tap] weight matrices
    mask_ref: (1, Lk) f32  -- 1.0 on valid output lanes, 0.0 on pad/garbage
    y4_ref  : (1, 4, outer, Lk) f32  -- raw (un-normalized) parity outputs
    st_ref  : (1, outer, 2) f32      -- per-sample [sum, sum-of-squares]
    Tap (p=a*2+b, t=dh*2+dw) reads lane offset (a+dh)*wp + (b+dw).
    """
    v = y3p_ref[0]                                   # (inner_pad, Lp) bf16
    mask = mask_ref[...]                             # (1, Lk) f32
    outer = y4_ref.shape[2]
    s1 = jnp.zeros((outer, 1), jnp.float32)
    s2 = jnp.zeros((outer, 1), jnp.float32)
    for p in range(4):                               # output parity p = a*2 + b
        a, b = p // 2, p % 2
        acc = None
        for t in range(4):                           # tap t = dh*2 + dw
            dh, dw = t // 2, t % 2
            off = (a + dh) * wp + (b + dw)
            d = jnp.dot(w2_ref[p, t], v[:, off:off + l_keep],
                        preferred_element_type=jnp.float32)
            acc = d if acc is None else acc + d
        acc = acc * mask                             # zero padded/garbage lanes
        y4_ref[0, p] = acc                           # write straight to output
        s1 = s1 + jnp.sum(acc, axis=1, keepdims=True)
        s2 = s2 + jnp.sum(acc * acc, axis=1, keepdims=True)
    st_ref[0, :, 0:1] = s1                           # per-sample partial stats
    st_ref[0, :, 1:2] = s2


# ---------------------------------------------------------------------------
# Wrapper
# ---------------------------------------------------------------------------
@jax.jit
def unet_innermost_block(x, w_down, w_up, gamma, beta):
    """x: (N, input_nc, H, W) NCHW.  Returns cat([x, block(x)], channel axis)."""
    N, C_in, H, W = x.shape
    inner_nc = w_down.shape[0]                 # Conv2d weight:  (inner, in, 4, 4)
    outer_nc = w_up.shape[1]                   # ConvT weight:   (inner, outer, 4, 4)
    Ho, Wo = H // 2, W // 2
    Hp, Wp = Ho + 2, Wo + 2
    S = Ho * Wo
    K1 = C_in * 16
    inner_pad = _round_up(inner_nc, 16)        # full bf16 sublane tile
    Lk = Ho * Wp                               # up-kernel matmul lane extent
    Lp = Hp * Wp + 2                           # padded flat spatial (+2 keeps slices in bounds)

    # ---- down glue: LeakyReLU folded into the im2col gather (one pass over x) ----
    a = jnp.where(x > 0, x, 0.2 * x)
    ap = jnp.pad(a, ((0, 0), (0, 0), (1, 1), (1, 1)))
    ih = (jnp.arange(Ho) * 2)[:, None] + jnp.arange(4)[None, :]          # (Ho, 4)
    iw = (jnp.arange(Wo) * 2)[:, None] + jnp.arange(4)[None, :]          # (Wo, 4)
    p1 = ap[:, :, ih[:, :, None, None], iw[None, None, :, :]]            # (N,C,Ho,4,Wo,4)
    p1 = jnp.transpose(p1, (0, 1, 3, 5, 2, 4)).reshape(N, K1, S)         # (c,kh,kw) K order
    p1 = p1.astype(jnp.bfloat16)

    w1 = w_down.reshape(inner_nc, K1)
    w1 = jnp.pad(w1, ((0, inner_pad - inner_nc), (0, 0))).astype(jnp.bfloat16)

    # ---- down kernel: per-sample, spatial-tiled, fully "parallel" grid ----------
    ts = _pick_spatial_tile(S)
    down_blocks = (K1 * ts + inner_pad * K1 + inner_pad * ts) * 2        # bf16 bytes
    y3 = pl.pallas_call(
        _down_kernel,
        out_shape=jax.ShapeDtypeStruct((N, inner_pad, S), jnp.bfloat16),
        grid=(N, S // ts),
        in_specs=[pl.BlockSpec((1, K1, ts), lambda n, r: (n, 0, r)),
                  pl.BlockSpec((inner_pad, K1), lambda n, r: (0, 0))],
        out_specs=pl.BlockSpec((1, inner_pad, ts), lambda n, r: (n, 0, r)),
        compiler_params=pltpu.CompilerParams(
            dimension_semantics=("parallel", "parallel"),
            vmem_limit_bytes=_vmem_limit(down_blocks)),
        cost_estimate=pl.CostEstimate(
            flops=2 * N * inner_pad * K1 * S,
            transcendentals=0,
            bytes_accessed=2 * (N * K1 * S + inner_pad * K1 + N * inner_pad * S)),
    )(p1, w1)                                                   # (N, inner_pad, S) bf16

    # ---- up glue: pad y3 spatially and flatten (~1.6x of y3; no 16x p2 blow-up) --
    y3p = jnp.pad(y3.reshape(N, inner_pad, Ho, Wo),
                  ((0, 0), (0, 0), (1, 1), (1, 1))).reshape(N, inner_pad, Hp * Wp)
    y3p = jnp.pad(y3p, ((0, 0), (0, 0), (0, Lp - Hp * Wp)))

    # ConvT(k4,s2,p1) == 4 parity 2x2 convs; tap (p=a*2+b, t=dh*2+dw) uses kernel
    # element (3-a-2dh, 3-b-2dw) and lane offset (a+dh)*Wp + (b+dw).
    w_up_p = jnp.pad(w_up, ((0, inner_pad - inner_nc), (0, 0), (0, 0), (0, 0)))
    a_idx = jnp.array([0, 0, 1, 1]); b_idx = jnp.array([0, 1, 0, 1])     # parity p
    dh_idx = jnp.array([0, 0, 1, 1]); dw_idx = jnp.array([0, 1, 0, 1])   # tap t
    kh = 3 - a_idx[:, None] - 2 * dh_idx[None, :]                        # (4, 4)
    kw = 3 - b_idx[:, None] - 2 * dw_idx[None, :]                        # (4, 4)
    w2 = w_up_p[:, :, kh, kw]                                            # (inner_pad, outer, 4, 4)
    w2 = jnp.transpose(w2, (2, 3, 1, 0)).astype(jnp.bfloat16)            # (4, 4, outer, inner_pad)

    mask = ((jnp.arange(Lk) % Wp) < Wo).astype(jnp.float32).reshape(1, Lk)

    up_blocks = (inner_pad * Lp * 2 + 16 * outer_nc * inner_pad * 2
                 + Lk * 4 + 4 * outer_nc * Lk * 4 + outer_nc * 2 * 4)
    y4, stats = pl.pallas_call(
        functools.partial(_up_kernel, wp=Wp, l_keep=Lk),
        out_shape=(jax.ShapeDtypeStruct((N, 4, outer_nc, Lk), jnp.float32),
                   jax.ShapeDtypeStruct((N, outer_nc, 2), jnp.float32)),
        grid=(N,),
        in_specs=[pl.BlockSpec((1, inner_pad, Lp), lambda n: (n, 0, 0)),
                  pl.BlockSpec((4, 4, outer_nc, inner_pad), lambda n: (0, 0, 0, 0)),
                  pl.BlockSpec((1, Lk), lambda n: (0, 0))],
        out_specs=(pl.BlockSpec((1, 4, outer_nc, Lk), lambda n: (n, 0, 0, 0)),
                   pl.BlockSpec((1, outer_nc, 2), lambda n: (n, 0, 0))),
        compiler_params=pltpu.CompilerParams(
            dimension_semantics=("parallel",),
            vmem_limit_bytes=_vmem_limit(up_blocks)),
        cost_estimate=pl.CostEstimate(
            flops=2 * N * 16 * outer_nc * inner_pad * Lk + 8 * N * outer_nc * Lk,
            transcendentals=0,
            bytes_accessed=(2 * N * inner_pad * Lp + 2 * 16 * outer_nc * inner_pad
                            + 4 * Lk + 4 * N * 4 * outer_nc * Lk
                            + 4 * N * outer_nc * 2)),
    )(y3p, w2, mask)

    # ---- epilogue (one fused XLA pass): merge per-sample stats, normalize,
    #      de-interleave parities to NCHW, concat the skip -------------------------
    count = N * H * W
    mean = jnp.sum(stats[..., 0], axis=0) / count                        # (outer,)
    var = jnp.sum(stats[..., 1], axis=0) / count - mean * mean           # biased var
    scale = gamma * lax.rsqrt(var + 1e-5)
    shift = beta - mean * scale

    y4v = y4.reshape(N, 2, 2, outer_nc, Ho, Wp)[..., :Wo]                # (N,a,b,o,Ho,Wo)
    y5 = (y4v * scale.reshape(1, 1, 1, outer_nc, 1, 1)
          + shift.reshape(1, 1, 1, outer_nc, 1, 1))
    y5 = jnp.transpose(y5, (0, 3, 4, 1, 5, 2)).reshape(N, outer_nc, H, W)
    return jnp.concatenate([x, y5.astype(x.dtype)], axis=1)


# ---------------------------------------------------------------------------
# Reference (same bf16-matmul / f32-accumulate precision, independent lowering)
# ---------------------------------------------------------------------------
def _reference(x, w_down, w_up, gamma, beta):
    dn = ("NCHW", "OIHW", "NCHW")
    a = jnp.where(x > 0, x, 0.2 * x).astype(jnp.bfloat16)
    y2 = lax.conv_general_dilated(a, w_down.astype(jnp.bfloat16),
                                  window_strides=(2, 2), padding=((1, 1), (1, 1)),
                                  dimension_numbers=dn,
                                  preferred_element_type=jnp.float32)
    y3 = jnp.maximum(y2, 0.0).astype(jnp.bfloat16)
    w_up_conv = jnp.flip(w_up, axis=(2, 3)).transpose(1, 0, 2, 3).astype(jnp.bfloat16)
    y4 = lax.conv_general_dilated(y3, w_up_conv, window_strides=(1, 1),
                                  padding=((2, 2), (2, 2)), lhs_dilation=(2, 2),
                                  dimension_numbers=dn,
                                  preferred_element_type=jnp.float32)
    mean = jnp.mean(y4, axis=(0, 2, 3), keepdims=True)
    var = jnp.mean(jnp.square(y4 - mean), axis=(0, 2, 3), keepdims=True)
    y5 = (y4 - mean) * lax.rsqrt(var + 1e-5)
    y5 = y5 * gamma.reshape(1, -1, 1, 1) + beta.reshape(1, -1, 1, 1)
    return jnp.concatenate([x, y5], axis=1)


if __name__ == "__main__":
    # Module config: outer_nc=4, inner_nc=8, input_nc=None -> 4, innermost=True,
    # norm_layer=BatchNorm2d (conv/convT bias=False).
    N, input_nc, H, W = 2, 4, 16, 16
    inner_nc, outer_nc = 8, 4

    key = jax.random.PRNGKey(0)
    kx, kd, ku = jax.random.split(key, 3)
    x = jax.random.normal(kx, (N, input_nc, H, W), jnp.float32)
    w_down = jax.random.normal(kd, (inner_nc, input_nc, 4, 4), jnp.float32) * 0.05
    w_up = jax.random.normal(ku, (inner_nc, outer_nc, 4, 4), jnp.float32) * 0.05
    gamma = jnp.ones((outer_nc,), jnp.float32)   # BatchNorm2d default init
    beta = jnp.zeros((outer_nc,), jnp.float32)

    out = jax.block_until_ready(unet_innermost_block(x, w_down, w_up, gamma, beta))
    assert out.shape == (N, input_nc + outer_nc, H, W), out.shape

    ref = jax.block_until_ready(_reference(x, w_down, w_up, gamma, beta))
    err = float(jnp.max(jnp.abs(out - ref)))
    assert err < 2e-3, err

    print("KERNEL_OK")
</pallas_src>

<mosaic_0001>
module attributes {stable_mosaic.version = 11 : i64} {
  func.func @_down_kernel(%arg0: i32, %arg1: i32, %arg2: memref<1x64x64xbf16, #tpu.memory_space<vmem>>, %arg3: memref<16x64xbf16, #tpu.memory_space<vmem>>, %arg4: memref<1x16x64xbf16, #tpu.memory_space<vmem>>) attributes {dimension_semantics = [#tpu.dimension_semantics<parallel>, #tpu.dimension_semantics<parallel>], iteration_bounds = array<i64: 2, 1>, scalar_prefetch = 0 : i64, scratch_operands = 0 : i64, tpu.core_type = #tpu.core_type<tc>, window_params = [{transform_indices = @transform_0, window_bounds = array<i64: 1, 64, 64>}, {pipeline_mode = #tpu.pipeline_mode<synchronous>, transform_indices = @transform_1, window_bounds = array<i64: 16, 64>}, {transform_indices = @transform_2, window_bounds = array<i64: 1, 16, 64>}]} {
    %c0 = arith.constant 0 : index
    %c0_0 = arith.constant 0 : index
    %0 = vector.load %arg3[%c0, %c0_0] : memref<16x64xbf16, #tpu.memory_space<vmem>>, vector<16x64xbf16>
    %c0_1 = arith.constant 0 : index
    %c0_2 = arith.constant 0 : index
    %c0_3 = arith.constant 0 : index
    %1 = vector.load %arg2[%c0_1, %c0_2, %c0_3] : memref<1x64x64xbf16, #tpu.memory_space<vmem>>, vector<1x64x64xbf16>
    %2 = vector.shape_cast %1 : vector<1x64x64xbf16> to vector<64x64xbf16>
    %cst = arith.constant dense<0.000000e+00> : vector<16x64xf32>
    %3 = tpu.matmul %0, %2, %cst {dimension_numbers = #tpu.dot_dimension_numbers<[1], [0], [0], [1], [0, 0, 1, 1], [], []>} : vector<16x64xbf16>, vector<64x64xbf16>, vector<16x64xf32> -> vector<16x64xf32>
    %cst_4 = arith.constant 0.000000e+00 : f32
    %4 = vector.broadcast %cst_4 : f32 to vector<16x64xf32>
    %5 = arith.maximumf %3, %4 : vector<16x64xf32>
    %6 = arith.truncf %5 : vector<16x64xf32> to vector<16x64xbf16>
    %c0_5 = arith.constant 0 : index
    %c0_6 = arith.constant 0 : index
    %c0_7 = arith.constant 0 : index
    %7 = vector.load %arg4[%c0_5, %c0_6, %c0_7] : memref<1x16x64xbf16, #tpu.memory_space<vmem>>, vector<1x16x64xbf16>
    %8 = vector.shape_cast %7 : vector<1x16x64xbf16> to vector<16x64xbf16>
    %9 = vector.shape_cast %6 : vector<16x64xbf16> to vector<1x16x64xbf16>
    tpu.vector_store %arg4[%c0_5, %c0_6, %c0_7], %9 {strides = array<i32>} : memref<1x16x64xbf16, #tpu.memory_space<vmem>>, vector<1x16x64xbf16>,
    return
  }
  func.func @transform_0(%arg0: i32, %arg1: i32) -> (i32, i32, i32) {
    %c0_i32 = arith.constant 0 : i32
    %c0_i32_0 = arith.constant 0 : i32
    return %arg0, %c0_i32, %arg1 : i32, i32, i32
  }
  func.func @transform_1(%arg0: i32, %arg1: i32) -> (i32, i32) {
    %c0_i32 = arith.constant 0 : i32
    %c0_i32_0 = arith.constant 0 : i32
    %c0_i32_1 = arith.constant 0 : i32
    return %c0_i32, %c0_i32_0 : i32, i32
  }
  func.func @transform_2(%arg0: i32, %arg1: i32) -> (i32, i32, i32) {
    %c0_i32 = arith.constant 0 : i32
    %c0_i32_0 = arith.constant 0 : i32
    return %arg0, %c0_i32, %arg1 : i32, i32, i32
  }
}

module attributes {stable_mosaic.version = 11 : i64} {
  func.func @_up_kernel(%arg0: i32, %arg1: memref<1x16x102xbf16, #tpu.memory_space<vmem>>, %arg2: memref<4x4x4x16xbf16, #tpu.memory_space<vmem>>, %arg3: memref<1x80xf32, #tpu.memory_space<vmem>>, %arg4: memref<1x4x4x80xf32, #tpu.memory_space<vmem>>, %arg5: memref<1x4x2xf32, #tpu.memory_space<vmem>>) attributes {dimension_semantics = [#tpu.dimension_semantics<parallel>], iteration_bounds = array<i64: 2>, scalar_prefetch = 0 : i64, scratch_operands = 0 : i64, tpu.core_type = #tpu.core_type<tc>, window_params = [{transform_indices = @transform_0, window_bounds = array<i64: 1, 16, 102>}, {pipeline_mode = #tpu.pipeline_mode<synchronous>, transform_indices = @transform_1, window_bounds = array<i64: 4, 4, 4, 16>}, {pipeline_mode = #tpu.pipeline_mode<synchronous>, transform_indices = @transform_2, window_bounds = array<i64: 1, 80>}, {transform_indices = @transform_3, window_bounds = array<i64: 1, 4, 4, 80>}, {transform_indices = @transform_4, window_bounds = array<i64: 1, 4, 2>}]} {
    %c0 = arith.constant 0 : index
    %c0_0 = arith.constant 0 : index
    %c0_1 = arith.constant 0 : index
    %0 = vector.load %arg1[%c0, %c0_0, %c0_1] : memref<1x16x102xbf16, #tpu.memory_space<vmem>>, vector<1x16x102xbf16>
    %1 = vector.shape_cast %0 : vector<1x16x102xbf16> to vector<16x102xbf16>
    %c0_2 = arith.constant 0 : index
    %c0_3 = arith.constant 0 : index
    %2 = vector.load %arg3[%c0_2, %c0_3] : memref<1x80xf32, #tpu.memory_space<vmem>>, vector<1x80xf32>
    %cst = arith.constant 0.000000e+00 : f32
    %3 = vector.broadcast %cst : f32 to vector<4x1xf32>
    %cst_4 = arith.constant 0.000000e+00 : f32
    %4 = vector.broadcast %cst_4 : f32 to vector<4x1xf32>
    %c0_5 = arith.constant 0 : index
    %c0_6 = arith.constant 0 : index
    %c0_7 = arith.constant 0 : index
    %c0_8 = arith.constant 0 : index
    %5 = vector.load %arg2[%c0_5, %c0_6, %c0_7, %c0_8] : memref<4x4x4x16xbf16, #tpu.memory_space<vmem>>, vector<1x1x4x16xbf16>
    %6 = vector.shape_cast %5 : vector<1x1x4x16xbf16> to vector<4x16xbf16>
    %7 = vector.extract_strided_slice %1 {offsets = [0, 0], sizes = [16, 80], strides = [1, 1]} : vector<16x102xbf16> to vector<16x80xbf16>
    %cst_9 = arith.constant dense<0.000000e+00> : vector<4x80xf32>
    %8 = tpu.matmul %6, %7, %cst_9 {dimension_numbers = #tpu.dot_dimension_numbers<[1], [0], [0], [1], [0, 0, 1, 1], [], []>} : vector<4x16xbf16>, vector<16x80xbf16>, vector<4x80xf32> -> vector<4x80xf32>
    %c0_10 = arith.constant 0 : index
    %c1 = arith.constant 1 : index
    %c0_11 = arith.constant 0 : index
    %c0_12 = arith.constant 0 : index
    %9 = vector.load %arg2[%c0_10, %c1, %c0_11, %c0_12] : memref<4x4x4x16xbf16, #tpu.memory_space<vmem>>, vector<1x1x4x16xbf16>
    %10 = vector.shape_cast %9 : vector<1x1x4x16xbf16> to vector<4x16xbf16>
    %11 = vector.extract_strided_slice %1 {offsets = [0, 1], sizes = [16, 80], strides = [1, 1]} : vector<16x102xbf16> to vector<16x80xbf16>
    %cst_13 = arith.constant dense<0.000000e+00> : vector<4x80xf32>
    %12 = tpu.matmul %10, %11, %cst_13 {dimension_numbers = #tpu.dot_dimension_numbers<[1], [0], [0], [1], [0, 0, 1, 1], [], []>} : vector<4x16xbf16>, vector<16x80xbf16>, vector<4x80xf32> -> vector<4x80xf32>
    %13 = arith.addf %8, %12 : vector<4x80xf32>
    %c0_14 = arith.constant 0 : index
    %c2 = arith.constant 2 : index
    %c0_15 = arith.constant 0 : index
    %c0_16 = arith.constant 0 : index
    %14 = vector.load %arg2[%c0_14, %c2, %c0_15, %c0_16] : memref<4x4x4x16xbf16, #tpu.memory_space<vmem>>, vector<1x1x4x16xbf16>
    %15 = vector.shape_cast %14 : vector<1x1x4x16xbf16> to vector<4x16xbf16>
    %16 = vector.extract_strided_slice %1 {offsets = [0, 10], sizes = [16, 80], strides = [1, 1]} : vector<16x102xbf16> to vector<16x80xbf16>
    %cst_17 = arith.constant dense<0.000000e+00> : vector<4x80xf32>
    %17 = tpu.matmul %15, %16, %cst_17 {dimension_numbers = #tpu.dot_dimension_numbers<[1], [0], [0], [1], [0, 0, 1, 1], [], []>} : vector<4x16xbf16>, vector<16x80xbf16>, vector<4x80xf32> -> vector<4x80xf32>
    %18 = arith.addf %13, %17 : vector<4x80xf32>
    %c0_18 = arith.constant 0 : index
    %c3 = arith.constant 3 : index
    %c0_19 = arith.constant 0 : index
    %c0_20 = arith.constant 0 : index
    %19 = vector.load %arg2[%c0_18, %c3, %c0_19, %c0_20] : memref<4x4x4x16xbf16, #tpu.memory_space<vmem>>, vector<1x1x4x16xbf16>
    %20 = vector.shape_cast %19 : vector<1x1x4x16xbf16> to vector<4x16xbf16>
    %21 = vector.extract_strided_slice %1 {offsets = [0, 11], sizes = [16, 80], strides = [1, 1]} : vector<16x102xbf16> to vector<16x80xbf16>
    %cst_21 = arith.constant dense<0.000000e+00> : vector<4x80xf32>
    %22 = tpu.matmul %20, %21, %cst_21 {dimension_numbers = #tpu.dot_dimension_numbers<[1], [0], [0], [1], [0, 0, 1, 1], [], []>} : vector<4x16xbf16>, vector<16x80xbf16>, vector<4x80xf32> -> vector<4x80xf32>
    %23 = arith.addf %18, %22 : vector<4x80xf32>
    %24 = vector.broadcast %2 : vector<1x80xf32> to vector<4x80xf32>
    %25 = arith.mulf %23, %24 : vector<4x80xf32>
    %c0_22 = arith.constant 0 : index
    %c0_23 = arith.constant 0 : index
    %c0_24 = arith.constant 0 : index
    %c0_25 = arith.constant 0 : index
    %26 = vector.load %arg4[%c0_22, %c0_23, %c0_24, %c0_25] : memref<1x4x4x80xf32, #tpu.memory_space<vmem>>, vector<1x1x4x80xf32>
    %27 = vector.shape_cast %26 : vector<1x1x4x80xf32> to vector<4x80xf32>
    %28 = vector.shape_cast %25 : vector<4x80xf32> to vector<1x1x4x80xf32>
    tpu.vector_store %arg4[%c0_22, %c0_23, %c0_24, %c0_25], %28 {strides = array<i32>} : memref<1x4x4x80xf32, #tpu.memory_space<vmem>>, vector<1x1x4x80xf32>,
    %cst_26 = arith.constant dense<0.000000e+00> : vector<4xf32>
    %29 = vector.multi_reduction <add>, %25, %cst_26 [1] : vector<4x80xf32> to vector<4xf32>
    %30 = vector.shape_cast %29 : vector<4xf32> to vector<4x1xf32>
    %31 = arith.addf %3, %30 : vector<4x1xf32>
    %32 = arith.mulf %25, %25 : vector<4x80xf32>
    %cst_27 = arith.constant dense<0.000000e+00> : vector<4xf32>
    %33 = vector.multi_reduction <add>, %32, %cst_27 [1] : vector<4x80xf32> to vector<4xf32>
    %34 = vector.shape_cast %33 : vector<4xf32> to vector<4x1xf32>
    %35 = arith.addf %4, %34 : vector<4x1xf32>
    %c1_28 = arith.constant 1 : index
    %c0_29 = arith.constant 0 : index
    %c0_30 = arith.constant 0 : index
    %c0_31 = arith.constant 0 : index
    %36 = vector.load %arg2[%c1_28, %c0_29, %c0_30, %c0_31] : memref<4x4x4x16xbf16, #tpu.memory_space<vmem>>, vector<1x1x4x16xbf16>
    %37 = vector.shape_cast %36 : vector<1x1x4x16xbf16> to vector<4x16xbf16>
    %38 = vector.extract_strided_slice %1 {offsets = [0, 1], sizes = [16, 80], strides = [1, 1]} : vector<16x102xbf16> to vector<16x80xbf16>
    %cst_32 = arith.constant dense<0.000000e+00> : vector<4x80xf32>
    %39 = tpu.matmul %37, %38, %cst_32 {dimension_numbers = #tpu.dot_dimension_numbers<[1], [0], [0], [1], [0, 0, 1, 1], [], []>} : vector<4x16xbf16>, vector<16x80xbf16>, vector<4x80xf32> -> vector<4x80xf32>
    %c1_33 = arith.constant 1 : index
    %c1_34 = arith.constant 1 : index
    %c0_35 = arith.constant 0 : index
    %c0_36 = arith.constant 0 : index
    %40 = vector.load %arg2[%c1_33, %c1_34, %c0_35, %c0_36] : memref<4x4x4x16xbf16, #tpu.memory_space<vmem>>, vector<1x1x4x16xbf16>
    %41 = vector.shape_cast %40 : vector<1x1x4x16xbf16> to vector<4x16xbf16>
    %42 = vector.extract_strided_slice %1 {offsets = [0, 2], sizes = [16, 80], strides = [1, 1]} : vector<16x102xbf16> to vector<16x80xbf16>
    %cst_37 = arith.constant dense<0.000000e+00> : vector<4x80xf32>
    %43 = tpu.matmul %41, %42, %cst_37 {dimension_numbers = #tpu.dot_dimension_numbers<[1], [0], [0], [1], [0, 0, 1, 1], [], []>} : vector<4x16xbf16>, vector<16x80xbf16>, vector<4x80xf32> -> vector<4x80xf32>
    %44 = arith.addf %39, %43 : vector<4x80xf32>
    %c1_38 = arith.constant 1 : index
    %c2_39 = arith.constant 2 : index
    %c0_40 = arith.constant 0 : index
    %c0_41 = arith.constant 0 : index
    %45 = vector.load %arg2[%c1_38, %c2_39, %c0_40, %c0_41] : memref<4x4x4x16xbf16, #tpu.memory_space<vmem>>, vector<1x1x4x16xbf16>
    %46 = vector.shape_cast %45 : vector<1x1x4x16xbf16> to vector<4x16xbf16>
    %47 = vector.extract_strided_slice %1 {offsets = [0, 11], sizes = [16, 80], strides = [1, 1]} : vector<16x102xbf16> to vector<16x80xbf16>
    %cst_42 = arith.constant dense<0.000000e+00> : vector<4x80xf32>
    %48 = tpu.matmul %46, %47, %cst_42 {dimension_numbers = #tpu.dot_dimension_numbers<[1], [0], [0], [1], [0, 0, 1, 1], [], []>} : vector<4x16xbf16>, vector<16x80xbf16>, vector<4x80xf32> -> vector<4x80xf32>
    %49 = arith.addf %44, %48 : vector<4x80xf32>
    %c1_43 = arith.constant 1 : index
    %c3_44 = arith.constant 3 : index
    %c0_45 = arith.constant 0 : index
    %c0_46 = arith.constant 0 : index
    %50 = vector.load %arg2[%c1_43, %c3_44, %c0_45, %c0_46] : memref<4x4x4x16xbf16, #tpu.memory_space<vmem>>, vector<1x1x4x16xbf16>
    %51 = vector.shape_cast %50 : vector<1x1x4x16xbf16> to vector<4x16xbf16>
    %52 = vector.extract_strided_slice %1 {offsets = [0, 12], sizes = [16, 80], strides = [1, 1]} : vector<16x102xbf16> to vector<16x80xbf16>
    %cst_47 = arith.constant dense<0.000000e+00> : vector<4x80xf32>
    %53 = tpu.matmul %51, %52, %cst_47 {dimension_numbers = #tpu.dot_dimension_numbers<[1], [0], [0], [1], [0, 0, 1, 1], [], []>} : vector<4x16xbf16>, vector<16x80xbf16>, vector<4x80xf32> -> vector<4x80xf32>
    %54 = arith.addf %49, %53 : vector<4x80xf32>
    %55 = vector.broadcast %2 : vector<1x80xf32> to vector<4x80xf32>
    %56 = arith.mulf %54, %55 : vector<4x80xf32>
    %c0_48 = arith.constant 0 : index
    %c1_49 = arith.constant 1 : index
    %c0_50 = arith.constant 0 : index
    %c0_51 = arith.constant 0 : index
    %57 = vector.load %arg4[%c0_48, %c1_49, %c0_50, %c0_51] : memref<1x4x4x80xf32, #tpu.memory_space<vmem>>, vector<1x1x4x80xf32>
    %58 = vector.shape_cast %57 : vector<1x1x4x80xf32> to vector<4x80xf32>
    %59 = vector.shape_cast %56 : vector<4x80xf32> to vector<1x1x4x80xf32>
    tpu.vector_store %arg4[%c0_48, %c1_49, %c0_50, %c0_51], %59 {strides = array<i32>} : memref<1x4x4x80xf32, #tpu.memory_space<vmem>>, vector<1x1x4x80xf32>,
    %cst_52 = arith.constant dense<0.000000e+00> : vector<4xf32>
    %60 = vector.multi_reduction <add>, %56, %cst_52 [1] : vector<4x80xf32> to vector<4xf32>
    %61 = vector.shape_cast %60 : vector<4xf32> to vector<4x1xf32>
    %62 = arith.addf %31, %61 : vector<4x1xf32>
    %63 = arith.mulf %56, %56 : vector<4x80xf32>
    %cst_53 = arith.constant dense<0.000000e+00> : vector<4xf32>
    %64 = vector.multi_reduction <add>, %63, %cst_53 [1] : vector<4x80xf32> to vector<4xf32>
    %65 = vector.shape_cast %64 : vector<4xf32> to vector<4x1xf32>
    %66 = arith.addf %35, %65 : vector<4x1xf32>
    %c2_54 = arith.constant 2 : index
    %c0_55 = arith.constant 0 : index
    %c0_56 = arith.constant 0 : index
    %c0_57 = arith.constant 0 : index
    %67 = vector.load %arg2[%c2_54, %c0_55, %c0_56, %c0_57] : memref<4x4x4x16xbf16, #tpu.memory_space<vmem>>, vector<1x1x4x16xbf16>
    %68 = vector.shape_cast %67 : vector<1x1x4x16xbf16> to vector<4x16xbf16>
    %69 = vector.extract_strided_slice %1 {offsets = [0, 10], sizes = [16, 80], strides = [1, 1]} : vector<16x102xbf16> to vector<16x80xbf16>
    %cst_58 = arith.constant dense<0.000000e+00> : vector<4x80xf32>
    %70 = tpu.matmul %68, %69, %cst_58 {dimension_numbers = #tpu.dot_dimension_numbers<[1], [0], [0], [1], [0, 0, 1, 1], [], []>} : vector<4x16xbf16>, vector<16x80xbf16>, vector<4x80xf32> -> vector<4x80xf32>
    %c2_59 = arith.constant 2 : index
    %c1_60 = arith.constant 1 : index
    %c0_61 = arith.constant 0 : index
    %c0_62 = arith.constant 0 : index
    %71 = vector.load %arg2[%c2_59, %c1_60, %c0_61, %c0_62] : memref<4x4x4x16xbf16, #tpu.memory_space<vmem>>, vector<1x1x4x16xbf16>
    %72 = vector.shape_cast %71 : vector<1x1x4x16xbf16> to vector<4x16xbf16>
    %73 = vector.extract_strided_slice %1 {offsets = [0, 11], sizes = [16, 80], strides = [1, 1]} : vector<16x102xbf16> to vector<16x80xbf16>
    %cst_63 = arith.constant dense<0.000000e+00> : vector<4x80xf32>
    %74 = tpu.matmul %72, %73, %cst_63 {dimension_numbers = #tpu.dot_dimension_numbers<[1], [0], [0], [1], [0, 0, 1, 1], [], []>} : vector<4x16xbf16>, vector<16x80xbf16>, vector<4x80xf32> -> vector<4x80xf32>
    %75 = arith.addf %70, %74 : vector<4x80xf32>
    %c2_64 = arith.constant 2 : index
    %c2_65 = arith.constant 2 : index
    %c0_66 = arith.constant 0 : index
    %c0_67 = arith.constant 0 : index
    %76 = vector.load %arg2[%c2_64, %c2_65, %c0_66, %c0_67] : memref<4x4x4x16xbf16, #tpu.memory_space<vmem>>, vector<1x1x4x16xbf16>
    %77 = vector.shape_cast %76 : vector<1x1x4x16xbf16> to vector<4x16xbf16>
    %78 = vector.extract_strided_slice %1 {offsets = [0, 20], sizes = [16, 80], strides = [1, 1]} : vector<16x102xbf16> to vector<16x80xbf16>
    %cst_68 = arith.constant dense<0.000000e+00> : vector<4x80xf32>
    %79 = tpu.matmul %77, %78, %cst_68 {dimension_numbers = #tpu.dot_dimension_numbers<[1], [0], [0], [1], [0, 0, 1, 1], [], []>} : vector<4x16xbf16>, vector<16x80xbf16>, vector<4x80xf32> -> vector<4x80xf32>
    %80 = arith.addf %75, %79 : vector<4x80xf32>
    %c2_69 = arith.constant 2 : index
    %c3_70 = arith.constant 3 : index
    %c0_71 = arith.constant 0 : index
    %c0_72 = arith.constant 0 : index
    %81 = vector.load %arg2[%c2_69, %c3_70, %c0_71, %c0_72] : memref<4x4x4x16xbf16, #tpu.memory_space<vmem>>, vector<1x1x4x16xbf16>
    %82 = vector.shape_cast %81 : vector<1x1x4x16xbf16> to vector<4x16xbf16>
    %83 = vector.extract_strided_slice %1 {offsets = [0, 21], sizes = [16, 80], strides = [1, 1]} : vector<16x102xbf16> to vector<16x80xbf16>
    %cst_73 = arith.constant dense<0.000000e+00> : vector<4x80xf32>
    %84 = tpu.matmul %82, %83, %cst_73 {dimension_numbers = #tpu.dot_dimension_numbers<[1], [0], [0], [1], [0, 0, 1, 1], [], []>} : vector<4x16xbf16>, vector<16x80xbf16>, vector<4x80xf32> -> vector<4x80xf32>
    %85 = arith.addf %80, %84 : vector<4x80xf32>
    %86 = vector.broadcast %2 : vector<1x80xf32> to vector<4x80xf32>
    %87 = arith.mulf %85, %86 : vector<4x80xf32>
    %c0_74 = arith.constant 0 : index
    %c2_75 = arith.constant 2 : index
    %c0_76 = arith.constant 0 : index
    %c0_77 = arith.constant 0 : index
    %88 = vector.load %arg4[%c0_74, %c2_75, %c0_76, %c0_77] : memref<1x4x4x80xf32, #tpu.memory_space<vmem>>, vector<1x1x4x80xf32>
    %89 = vector.shape_cast %88 : vector<1x1x4x80xf32> to vector<4x80xf32>
    %90 = vector.shape_cast %87 : vector<4x80xf32> to vector<1x1x4x80xf32>
    tpu.vector_store %arg4[%c0_74, %c2_75, %c0_76, %c0_77], %90 {strides = array<i32>} : memref<1x4x4x80xf32, #tpu.memory_space<vmem>>, vector<1x1x4x80xf32>,
    %cst_78 = arith.constant dense<0.000000e+00> : vector<4xf32>
    %91 = vector.multi_reduction <add>, %87, %cst_78 [1] : vector<4x80xf32> to vector<4xf32>
    %92 = vector.shape_cast %91 : vector<4xf32> to vector<4x1xf32>
    %93 = arith.addf %62, %92 : vector<4x1xf32>
    %94 = arith.mulf %87, %87 : vector<4x80xf32>
    %cst_79 = arith.constant dense<0.000000e+00> : vector<4xf32>
    %95 = vector.multi_reduction <add>, %94, %cst_79 [1] : vector<4x80xf32> to vector<4xf32>
    %96 = vector.shape_cast %95 : vector<4xf32> to vector<4x1xf32>
    %97 = arith.addf %66, %96 : vector<4x1xf32>
    %c3_80 = arith.constant 3 : index
    %c0_81 = arith.constant 0 : index
    %c0_82 = arith.constant 0 : index
    %c0_83 = arith.constant 0 : index
    %98 = vector.load %arg2[%c3_80, %c0_81, %c0_82, %c0_83] : memref<4x4x4x16xbf16, #tpu.memory_space<vmem>>, vector<1x1x4x16xbf16>
    %99 = vector.shape_cast %98 : vector<1x1x4x16xbf16> to vector<4x16xbf16>
    %100 = vector.extract_strided_slice %1 {offsets = [0, 11], sizes = [16, 80], strides = [1, 1]} : vector<16x102xbf16> to vector<16x80xbf16>
    %cst_84 = arith.constant dense<0.000000e+00> : vector<4x80xf32>
    %101 = tpu.matmul %99, %100, %cst_84 {dimension_numbers = #tpu.dot_dimension_numbers<[1], [0], [0], [1], [0, 0, 1, 1], [], []>} : vector<4x16xbf16>, vector<16x80xbf16>, vector<4x80xf32> -> vector<4x80xf32>
    %c3_85 = arith.constant 3 : index
    %c1_86 = arith.constant 1 : index
    %c0_87 = arith.constant 0 : index
    %c0_88 = arith.constant 0 : index
    %102 = vector.load %arg2[%c3_85, %c1_86, %c0_87, %c0_88] : memref<4x4x4x16xbf16, #tpu.memory_space<vmem>>, vector<1x1x4x16xbf16>
    %103 = vector.shape_cast %102 : vector<1x1x4x16xbf16> to vector<4x16xbf16>
    %104 = vector.extract_strided_slice %1 {offsets = [0, 12], sizes = [16, 80], strides = [1, 1]} : vector<16x102xbf16> to vector<16x80xbf16>
    %cst_89 = arith.constant dense<0.000000e+00> : vector<4x80xf32>
    %105 = tpu.matmul %103, %104, %cst_89 {dimension_numbers = #tpu.dot_dimension_numbers<[1], [0], [0], [1], [0, 0, 1, 1], [], []>} : vector<4x16xbf16>, vector<16x80xbf16>, vector<4x80xf32> -> vector<4x80xf32>
    %106 = arith.addf %101, %105 : vector<4x80xf32>
    %c3_90 = arith.constant 3 : index
    %c2_91 = arith.constant 2 : index
    %c0_92 = arith.constant 0 : index
    %c0_93 = arith.constant 0 : index
    %107 = vector.load %arg2[%c3_90, %c2_91, %c0_92, %c0_93] : memref<4x4x4x16xbf16, #tpu.memory_space<vmem>>, vector<1x1x4x16xbf16>
    %108 = vector.shape_cast %107 : vector<1x1x4x16xbf16> to vector<4x16xbf16>
    %109 = vector.extract_strided_slice %1 {offsets = [0, 21], sizes = [16, 80], strides = [1, 1]} : vector<16x102xbf16> to vector<16x80xbf16>
    %cst_94 = arith.constant dense<0.000000e+00> : vector<4x80xf32>
    %110 = tpu.matmul %108, %109, %cst_94 {dimension_numbers = #tpu.dot_dimension_numbers<[1], [0], [0], [1], [0, 0, 1, 1], [], []>} : vector<4x16xbf16>, vector<16x80xbf16>, vector<4x80xf32> -> vector<4x80xf32>
    %111 = arith.addf %106, %110 : vector<4x80xf32>
    %c3_95 = arith.constant 3 : index
    %c3_96 = arith.constant 3 : index
    %c0_97 = arith.constant 0 : index
    %c0_98 = arith.constant 0 : index
    %112 = vector.load %arg2[%c3_95, %c3_96, %c0_97, %c0_98] : memref<4x4x4x16xbf16, #tpu.memory_space<vmem>>, vector<1x1x4x16xbf16>
    %113 = vector.shape_cast %112 : vector<1x1x4x16xbf16> to vector<4x16xbf16>
    %114 = vector.extract_strided_slice %1 {offsets = [0, 22], sizes = [16, 80], strides = [1, 1]} : vector<16x102xbf16> to vector<16x80xbf16>
    %cst_99 = arith.constant dense<0.000000e+00> : vector<4x80xf32>
    %115 = tpu.matmul %113, %114, %cst_99 {dimension_numbers = #tpu.dot_dimension_numbers<[1], [0], [0], [1], [0, 0, 1, 1], [], []>} : vector<4x16xbf16>, vector<16x80xbf16>, vector<4x80xf32> -> vector<4x80xf32>
    %116 = arith.addf %111, %115 : vector<4x80xf32>
    %117 = vector.broadcast %2 : vector<1x80xf32> to vector<4x80xf32>
    %118 = arith.mulf %116, %117 : vector<4x80xf32>
    %c0_100 = arith.constant 0 : index
    %c3_101 = arith.constant 3 : index
    %c0_102 = arith.constant 0 : index
    %c0_103 = arith.constant 0 : index
    %119 = vector.load %arg4[%c0_100, %c3_101, %c0_102, %c0_103] : memref<1x4x4x80xf32, #tpu.memory_space<vmem>>, vector<1x1x4x80xf32>
    %120 = vector.shape_cast %119 : vector<1x1x4x80xf32> to vector<4x80xf32>
    %121 = vector.shape_cast %118 : vector<4x80xf32> to vector<1x1x4x80xf32>
    tpu.vector_store %arg4[%c0_100, %c3_101, %c0_102, %c0_103], %121 {strides = array<i32>} : memref<1x4x4x80xf32, #tpu.memory_space<vmem>>, vector<1x1x4x80xf32>,
    %cst_104 = arith.constant dense<0.000000e+00> : vector<4xf32>
    %122 = vector.multi_reduction <add>, %118, %cst_104 [1] : vector<4x80xf32> to vector<4xf32>
    %123 = vector.shape_cast %122 : vector<4xf32> to vector<4x1xf32>
    %124 = arith.addf %93, %123 : vector<4x1xf32>
    %125 = arith.mulf %118, %118 : vector<4x80xf32>
    %cst_105 = arith.constant dense<0.000000e+00> : vector<4xf32>
    %126 = vector.multi_reduction <add>, %125, %cst_105 [1] : vector<4x80xf32> to vector<4xf32>
    %127 = vector.shape_cast %126 : vector<4xf32> to vector<4x1xf32>
    %128 = arith.addf %97, %127 : vector<4x1xf32>
    %c0_106 = arith.constant 0 : index
    %c0_107 = arith.constant 0 : index
    %c0_108 = arith.constant 0 : index
    %129 = vector.load %arg5[%c0_106, %c0_107, %c0_108] : memref<1x4x2xf32, #tpu.memory_space<vmem>>, vector<1x4x1xf32>
    %130 = vector.shape_cast %129 : vector<1x4x1xf32> to vector<4x1xf32>
    %131 = vector.shape_cast %124 : vector<4x1xf32> to vector<1x4x1xf32>
    tpu.vector_store %arg5[%c0_106, %c0_107, %c0_108], %131 {strides = array<i32>} : memref<1x4x2xf32, #tpu.memory_space<vmem>>, vector<1x4x1xf32>,
    %c0_109 = arith.constant 0 : index
    %c0_110 = arith.constant 0 : index
    %c1_111 = arith.constant 1 : index
    %132 = vector.load %arg5[%c0_109, %c0_110, %c1_111] : memref<1x4x2xf32, #tpu.memory_space<vmem>>, vector<1x4x1xf32>
    %133 = vector.shape_cast %132 : vector<1x4x1xf32> to vector<4x1xf32>
    %134 = vector.shape_cast %128 : vector<4x1xf32> to vector<1x4x1xf32>
    tpu.vector_store %arg5[%c0_109, %c0_110, %c1_111], %134 {strides = array<i32>} : memref<1x4x2xf32, #tpu.memory_space<vmem>>, vector<1x4x1xf32>,
    return
  }
  func.func @transform_0(%arg0: i32) -> (i32, i32, i32) {
    %c0_i32 = arith.constant 0 : i32
    %c0_i32_0 = arith.constant 0 : i32
    %c0_i32_1 = arith.constant 0 : i32
    return %arg0, %c0_i32, %c0_i32_0 : i32, i32, i32
  }
  func.func @transform_1(%arg0: i32) -> (i32, i32, i32, i32) {
    %c0_i32 = arith.constant 0 : i32
    %c0_i32_0 = arith.constant 0 : i32
    %c0_i32_1 = arith.constant 0 : i32
    %c0_i32_2 = arith.constant 0 : i32
    %c0_i32_3 = arith.constant 0 : i32
    return %c0_i32, %c0_i32_0, %c0_i32_1, %c0_i32_2 : i32, i32, i32, i32
  }
  func.func @transform_2(%arg0: i32) -> (i32, i32) {
    %c0_i32 = arith.constant 0 : i32
    %c0_i32_0 = arith.constant 0 : i32
    %c0_i32_1 = arith.constant 0 : i32
    return %c0_i32, %c0_i32_0 : i32, i32
  }
  func.func @transform_3(%arg0: i32) -> (i32, i32, i32, i32) {
    %c0_i32 = arith.constant 0 : i32
    %c0_i32_0 = arith.constant 0 : i32
    %c0_i32_1 = arith.constant 0 : i32
    %c0_i32_2 = arith.constant 0 : i32
    return %arg0, %c0_i32, %c0_i32_0, %c0_i32_1 : i32, i32, i32, i32
  }
  func.func @transform_4(%arg0: i32) -> (i32, i32, i32) {
    %c0_i32 = arith.constant 0 : i32
    %c0_i32_0 = arith.constant 0 : i32
    %c0_i32_1 = arith.constant 0 : i32
    return %arg0, %c0_i32, %c0_i32_0 : i32, i32, i32
  }
}

</mosaic_0001>

<llo_original>
// kernel: unet_innermost_block.2
$region0: #{unet_innermost_block.2}
  #allocation0 [shape = 'u32[]', space=smem, size = 0x4, offset = 0x4, fixed_abs, tag = 'smem constant byte address 0x4 - core index']
  #allocation1 [shape = 'u32[72,128]{1,0:T(1,128)}', space=vmem, size = 0x9000, scoped, tag = 'internal scratch']
  %s0 = inlined_call_operand.vmem [shape: bf16[2,64,64], index: 0, kind: input, shape index: {}]
  %s1 = inlined_call_operand.vmem [shape: bf16[16,64], index: 1, kind: input, shape index: {}]
  %s2 = inlined_call_operand.vmem [shape: bf16[2,16,64], index: 2, kind: output, shape index: {}]
  %s3 = sld [smem:[#allocation0]]
  $region41: #{unet_innermost_block.2} parent=0
    _
  %s5 = ssub.s32 1, %s3
  %s6 = scalar_select 0, %s5, %s3
  loop: start=0, step=1, limit=4
  $region2: #{unet_innermost_block.2} parent=0 // loop_pre_header
    _
  $region3: #{unet_innermost_block.2} parent=0 // loop_header
    %s8 = sphi 0, %s12
    %p9 = scmp.ge.s32.totalorder %s8, 4
    %s15 = sphi 0, %s27
    %s16 = sphi 0, %s23
    %s17 = sphi 0, %s15
    %s18 = sphi 0, %s16
    %s19 = sphi 0, %s17
    %s20 = sphi 0, %s18
    %s32 = sphi 0, %s34
    %s35 = sphi 0, %s32
    %s36 = sphi 0, %s35
    %s52 = sphi 0, %s36
    %s56 = sphi 0, %s56
    %s58 = sphi 0, %s56
    %s59 = sphi 0, %s58
    %s73 = sphi 0, %s59
    %s81 = sphi 0, %s83
    %s84 = sphi 0, %s81
    %s85 = sphi 0, %s84
    %s101 = sphi 0, %s85
  $region4: #{unet_innermost_block.2} parent=0 // loop_header_branch
    %11 = sbr.rel (%p9) target = $region8
  $region5: #{unet_innermost_block.2} parent=0 // loop_body
    %s13 = ssub.s32 %s8, 1
    %s14 = ssub.s32 %s8, 2
    %s21 = sadd.s32 1, %s16
    %p22 = scmp.ge.s32.totalorder %s21, 1
    %s23 = scalar_select %p22, 0, %s21
    %s24 = sadd.s32 1, %s15
    %s25 = scalar_select %p22, %s24, %s15
    %p26 = scmp.ge.s32.totalorder %s25, 2
    %s27 = scalar_select %p26, 0, %s25
    %s28 = ssub.s32 %s15, %s27
    %s29 = ssub.s32 %s16, %s23
    %s30 = sor.u32 %s28, %s29
    %p31 = scmp.eq.s32.totalorder %s30, 0
    %s33 = sadd.s32 %s32, 1
    %s34 = scalar_select %p31, %s32, %s33
    %p37 = pneg %p31
    %p38 = scmp.eq.s32.totalorder %s8, 1
    %p39 = por %p37, %p38
    %p40 = scmp.ne.s32.totalorder %s32, %s35
    %p41 = scmp.eq.s32.totalorder %s8, 0
    %p42 = por %p40, %p41
    %p43 = scmp.ne.s32.totalorder %s32, %s35
    %p44 = scmp.eq.s32.totalorder %s13, 1
    %p45 = por %p43, %p44
    %p46 = scmp.ne.s32.totalorder %s35, %s36
    %p47 = scmp.eq.s32.totalorder %s13, 0
    %p48 = por %p46, %p47
    %p49 = scmp.ne.s32.totalorder %s35, %s36
    %p50 = scmp.eq.s32.totalorder %s14, 1
    %p51 = por %p49, %p50
    %p53 = scmp.ne.s32.totalorder %s36, %s52
    %p54 = scmp.eq.s32.totalorder %s14, 0
    %p55 = por %p53, %p54
    %s57 = sadd.s32 %s56, 1
    %p60 = scmp.eq.s32.totalorder %s8, 1
    %p61 = scmp.ne.s32.totalorder %s56, %s58
    %p62 = scmp.eq.s32.totalorder %s8, 0
    %p63 = por %p61, %p62
    %p64 = scmp.ne.s32.totalorder %s56, %s58
    %p65 = scmp.eq.s32.totalorder %s13, 1
    %p66 = por %p64, %p65
    %p67 = scmp.ne.s32.totalorder %s58, %s59
    %p68 = scmp.eq.s32.totalorder %s13, 0
    %p69 = por %p67, %p68
    %p70 = scmp.ne.s32.totalorder %s58, %s59
    %p71 = scmp.eq.s32.totalorder %s14, 1
    %p72 = por %p70, %p71
    %p74 = scmp.ne.s32.totalorder %s59, %s73
    %p75 = scmp.eq.s32.totalorder %s14, 0
    %p76 = por %p74, %p75
    %s77 = ssub.s32 %s15, %s27
    %s78 = ssub.s32 %s16, %s23
    %s79 = sor.u32 %s77, %s78
    %p80 = scmp.eq.s32.totalorder %s79, 0
    %s82 = sadd.s32 %s81, 1
    %s83 = scalar_select %p80, %s81, %s82
    %p86 = pneg %p80
    %p87 = scmp.eq.s32.totalorder %s8, 1
    %p88 = por %p86, %p87
    %p89 = scmp.ne.s32.totalorder %s81, %s84
    %p90 = scmp.eq.s32.totalorder %s8, 0
    %p91 = por %p89, %p90
    %p92 = scmp.ne.s32.totalorder %s81, %s84
    %p93 = scmp.eq.s32.totalorder %s13, 1
    %p94 = por %p92, %p93
    %p95 = scmp.ne.s32.totalorder %s84, %s85
    %p96 = scmp.eq.s32.totalorder %s13, 0
    %p97 = por %p95, %p96
    %p98 = scmp.ne.s32.totalorder %s84, %s85
    %p99 = scmp.eq.s32.totalorder %s14, 1
    %p100 = por %p98, %p99
    %p102 = scmp.ne.s32.totalorder %s85, %s101
    %p103 = scmp.eq.s32.totalorder %s14, 0
    %p104 = por %p102, %p103
    %p105 = scmp.le.s32.totalorder 1, %s8
    %p106 = scmp.lt.s32.totalorder %s8, 3
    %p107 = pnand %p105, %p106
    %p108 = pneg %p107
    // Predicated region
    $region9: #{unet_innermost_block.2} parent=5 // pred_check
      _
    $region10: #{unet_innermost_block.2} parent=5 // pred_check_branch
      %110 = sbr.rel (%p107) target = $region12
    $region11: #{unet_innermost_block.2} parent=5 // pred_region
      %s111 = ssub.s32 %s8, 1
      // Predicated region
      $region13: #{unet_innermost_block.2} parent=11 // pred_check
        %p112 = pneg %p69
      $region14: #{unet_innermost_block.2} parent=11 // pred_check_branch
        %114 = sbr.rel (%p112) target = $region16
      $region15: #{unet_innermost_block.2} parent=11 // pred_region
        _
      $region16: #{unet_innermost_block.2} parent=11 // pred_fallthru
        _
    $region12: #{unet_innermost_block.2} parent=5 // pred_fallthru
      _
    %p115 = scmp.lt.s32.totalorder %s8, 2
    // Predicated region
    $region17: #{unet_innermost_block.2} parent=5 // pred_check
      %p116 = pneg %p115
    $region18: #{unet_innermost_block.2} parent=5 // pred_check_branch
      %118 = sbr.rel (%p116) target = $region20
    $region19: #{unet_innermost_block.2} parent=5 // pred_region
      // Predicated region
      $region21: #{unet_innermost_block.2} parent=19 // pred_check
        %p119 = pneg %p42
      $region22: #{unet_innermost_block.2} parent=19 // pred_check_branch
        %121 = sbr.rel (%p119) target = $region24
      $region23: #{unet_innermost_block.2} parent=19 // pred_region
        %p122 = scmp.lt.s32.totalorder %s15, 1
        %s123 = scalar_select %p122, %s15, 1
        %p124 = scmp.lt.s32.totalorder %s16, 0
        %s125 = scalar_select %p124, %s16, 0
        %s126 = smul.addr %s123, 8
        %s127 = sadd.s32 %s125, %s126
        %s128 = smul.addr %s127, 4
        %s129 = scalar_lea.vmem %s0, %s128
      $region24: #{unet_innermost_block.2} parent=19 // pred_fallthru
        _
    $region20: #{unet_innermost_block.2} parent=5 // pred_fallthru
      _
    %p130 = scmp.le.s32.totalorder 1, %s8
    %p131 = scmp.lt.s32.totalorder %s8, 3
    %p132 = pnand %p130, %p131
    %p133 = pneg %p132
    // Predicated region
    $region25: #{unet_innermost_block.2} parent=5 // pred_check
      _
    $region26: #{unet_innermost_block.2} parent=5 // pred_check_branch
      %135 = sbr.rel (%p132) target = $region28
    $region27: #{unet_innermost_block.2} parent=5 // pred_region
      %s136 = ssub.s32 %s8, 1
      %p137 = scmp.lt.s32.totalorder %s17, 1
      %s138 = scalar_select %p137, %s17, 1
      %p139 = scmp.lt.s32.totalorder %s18, 0
      %s140 = scalar_select %p139, %s18, 0
      %s141 = smul.addr %s138, 8
      %s142 = sadd.s32 %s140, %s141
      %s143 = smul.addr %s142, 4
      %s144 = scalar_lea.vmem %s0, %s143
      %p145 = pneg %p48
      %p146 = pneg %p45
      %p147 = pneg %p69
      %p148 = pneg %p66
      %p149 = pneg %p97
      %p150 = pneg %p94
      %p151 = scmp.lt.s32.totalorder %s17, 1
      %s152 = scalar_select %p151, %s17, 1
      %p153 = scmp.lt.s32.totalorder %s18, 0
      %s154 = scalar_select %p153, %s18, 0
      %s155 = smul.addr %s152, 2
      %s156 = sadd.s32 %s154, %s155
      %s157 = smul.addr %s156, 4
      %s158 = scalar_lea.vmem %s2, %s157
      %p159 = scmp.lt.s32.totalorder %s17, 1
      %s160 = scalar_select %p159, %s17, 1
      %p161 = scmp.lt.s32.totalorder %s18, 0
      %s162 = scalar_select %p161, %s18, 0
      %s163 = smul.addr %s160, 8
      %s164 = sadd.s32 %s162, %s163
      %s165 = smul.addr %s164, 4
      %s166 = scalar_lea.vmem %s0, %s165
      %p167 = scmp.lt.s32.totalorder %s17, 1
      %s168 = scalar_select %p167, %s17, 1
      %p169 = scmp.lt.s32.totalorder %s18, 0
      %s170 = scalar_select %p169, %s18, 0
      %s171 = smul.addr %s168, 2
      %s172 = sadd.s32 %s170, %s171
      %s173 = smul.addr %s172, 4
      %s174 = scalar_lea.vmem %s2, %s173
      %v176 = vld [vmem:[%s1] sm:$0xf]
      %v177 = vld [vmem:[%s1 + $0x4] sm:$0xf]
      %v178 = vld [vmem:[%s166] sm:$0xf]
      %v179 = vld [vmem:[%s166 + $0x4] sm:$0xf]
      %v180 = vld [vmem:[%s166 + $0x8] sm:$0xf]
      %v181 = vld [vmem:[%s166 + $0xc] sm:$0xf]
      %v182 = vld [vmem:[%s166 + $0x10] sm:$0xf]
      %v183 = vld [vmem:[%s166 + $0x14] sm:$0xf]
      %v184 = vld [vmem:[%s166 + $0x18] sm:$0xf]
      %v185 = vld [vmem:[%s166 + $0x1c] sm:$0xf]
      %v188 = vunpack.c.l.b16 %v176
      %v189 = vunpack.c.l.b16 %v177
      %v190 = vpack.c.b16 %v189, %v188
      %v199 = vunpack.c.l.b16 %v178
      %v200 = vunpack.c.l.b16 %v179
      %v201 = vunpack.c.l.b16 %v180
      %v202 = vunpack.c.l.b16 %v181
      %v203 = vunpack.c.l.b16 %v182
      %v204 = vunpack.c.l.b16 %v183
      %v205 = vunpack.c.l.b16 %v184
      %v206 = vunpack.c.l.b16 %v185
      %v207 = vpack.c.b16 %v200, %v199
      %v208 = vpack.c.b16 %v202, %v201
      %v209 = vpack.c.b16 %v204, %v203
      %v210 = vpack.c.b16 %v206, %v205
      %vm215 = vcmask 523264
      %v217 = vsel %vm215, %v190, 0
      %219 = vmatpush.bf16.msra.mxu0 0
      %220 = vmatpush.bf16.msra.mxu0 0
      %221 = vmatpush.bf16.msra.mxu0 0
      %222 = vmatpush.bf16.msra.mxu0 0
      %223 = vmatpush.bf16.msra.mxu0 %v210
      %224 = vmatpush.bf16.msra.mxu0 %v209
      %225 = vmatpush.bf16.msra.mxu0 %v208
      %226 = vmatpush.bf16.msra.mxu0 %v207
      %227 = vmatmul.bf16.gmra.mxu0 %v217
      %v228 = vpop.f32.mrf.mxu0
      %v229 = vadd.f32 0.0, %v228
      %v230 = vpop.f32.mrf.mxu0
      %v231 = vadd.f32 0.0, %v230
      %232 = vdwg.mxu0
      %v233 = vmax.f32 %v229, 0.0
      %v234 = vmax.f32 %v231, 0.0
      %v235 = vpack.c.bf16 %v233, %v233
      %v236 = vpack.c.bf16 %v234, %v234
      %vm237 = vcmask 519168
      %238 = vst.msk [vmem:[%s174] sm:$0xf] %vm237, %v235
      %239 = vst.msk [vmem:[%s174 + $0x4] sm:$0xf] %vm237, %v236
      %p240 = scmp.lt.s32.totalorder %s17, 1
      %s241 = scalar_select %p240, %s17, 1
      %p242 = scmp.lt.s32.totalorder %s18, 0
      %s243 = scalar_select %p242, %s18, 0
      %s244 = smul.addr %s241, 2
      %s245 = sadd.s32 %s243, %s244
      %s246 = smul.addr %s245, 4
      %s247 = scalar_lea.vmem %s2, %s246
      // Predicated region
      $region29: #{unet_innermost_block.2} parent=27 // pred_check
        %p248 = pneg %p94
      $region30: #{unet_innermost_block.2} parent=27 // pred_check_branch
        %250 = sbr.rel (%p248) target = $region32
      $region31: #{unet_innermost_block.2} parent=27 // pred_region
        _
      $region32: #{unet_innermost_block.2} parent=27 // pred_fallthru
        _
    $region28: #{unet_innermost_block.2} parent=5 // pred_fallthru
      _
    %p251 = scmp.le.s32.totalorder 2, %s8
    // Predicated region
    $region33: #{unet_innermost_block.2} parent=5 // pred_check
      %p252 = pneg %p251
    $region34: #{unet_innermost_block.2} parent=5 // pred_check_branch
      %254 = sbr.rel (%p252) target = $region36
    $region35: #{unet_innermost_block.2} parent=5 // pred_region
      %s255 = ssub.s32 %s8, 2
      // Predicated region
      $region37: #{unet_innermost_block.2} parent=35 // pred_check
        %p256 = pneg %p100
      $region38: #{unet_innermost_block.2} parent=35 // pred_check_branch
        %258 = sbr.rel (%p256) target = $region40
      $region39: #{unet_innermost_block.2} parent=35 // pred_region
        %p259 = scmp.lt.s32.totalorder %s19, 1
        %s260 = scalar_select %p259, %s19, 1
        %p261 = scmp.lt.s32.totalorder %s20, 0
        %s262 = scalar_select %p261, %s20, 0
        %s263 = smul.addr %s260, 2
        %s264 = sadd.s32 %s262, %s263
        %s265 = smul.addr %s264, 4
        %s266 = scalar_lea.vmem %s2, %s265
      $region40: #{unet_innermost_block.2} parent=35 // pred_fallthru
        _
    $region36: #{unet_innermost_block.2} parent=5 // pred_fallthru
      _
  $region6: #{unet_innermost_block.2} parent=0 // loop_footer
    %s12 = sadd.s32 1, %s8
  $region7: #{unet_innermost_block.2} parent=0 // loop_footer_branch
    %7 = sbr.rel target = $region3
  $region8: #{unet_innermost_block.2} parent=0 // loop_exit
    _

// kernel: unet_innermost_block.3
$region0: #{unet_innermost_block.3}
  #allocation0 [shape = 'u32[]', space=smem, size = 0x4, offset = 0x4, fixed_abs, tag = 'smem constant byte address 0x4 - core index']
  #allocation1 [shape = 'u32[72,128]{1,0:T(1,128)}', space=vmem, size = 0x9000, scoped, tag = 'internal scratch']
  %s0 = inlined_call_operand.vmem [shape: bf16[2,16,102], index: 0, kind: input, shape index: {}]
  %s1 = inlined_call_operand.vmem [shape: bf16[4,4,4,16], index: 1, kind: input, shape index: {}]
  %s2 = inlined_call_operand.vmem [shape: f32[1,80], index: 2, kind: input, shape index: {}]
  %s3 = inlined_call_operand.vmem [shape: f32[2,4,4,80], index: 3, kind: output, shape index: {0}]
  %s4 = inlined_call_operand.vmem [shape: f32[2,4,2], index: 4, kind: output, shape index: {1}]
  %5 = xla_tuple %s3, %s4
  %s6 = sld [smem:[#allocation0]]
  $region53: #{unet_innermost_block.3} parent=0
    _
  %s8 = ssub.s32 1, %s6
  %s9 = scalar_select 0, %s8, %s6
  loop: start=0, step=1, limit=4
  $region2: #{unet_innermost_block.3} parent=0 // loop_pre_header
    _
  $region3: #{unet_innermost_block.3} parent=0 // loop_header
    %s11 = sphi 0, %s15
    %p12 = scmp.ge.s32.totalorder %s11, 4
    %s21 = sphi 0, %s23
    %s24 = sphi 0, %s21
    %s25 = sphi 0, %s24
    %s41 = sphi 0, %s25
    %s45 = sphi 0, %s45
    %s47 = sphi 0, %s45
    %s48 = sphi 0, %s47
    %s62 = sphi 0, %s48
    %s66 = sphi 0, %s66
    %s68 = sphi 0, %s66
    %s69 = sphi 0, %s68
    %s83 = sphi 0, %s69
    %s89 = sphi 0, %s91
    %s92 = sphi 0, %s89
    %s93 = sphi 0, %s92
    %s109 = sphi 0, %s93
    %s115 = sphi 0, %s117
    %s118 = sphi 0, %s115
    %s119 = sphi 0, %s118
    %s135 = sphi 0, %s119
  $region4: #{unet_innermost_block.3} parent=0 // loop_header_branch
    %14 = sbr.rel (%p12) target = $region8
  $region5: #{unet_innermost_block.3} parent=0 // loop_body
    %s16 = ssub.s32 %s11, 1
    %s17 = ssub.s32 %s11, 2
    %s18 = sadd.s32 %s11, 1
    %s19 = ssub.s32 %s11, %s18
    %p20 = scmp.eq.s32.totalorder %s19, 0
    %s22 = sadd.s32 %s21, 1
    %s23 = scalar_select %p20, %s21, %s22
    %p26 = pneg %p20
    %p27 = scmp.eq.s32.totalorder %s11, 1
    %p28 = por %p26, %p27
    %p29 = scmp.ne.s32.totalorder %s21, %s24
    %p30 = scmp.eq.s32.totalorder %s11, 0
    %p31 = por %p29, %p30
    %p32 = scmp.ne.s32.totalorder %s21, %s24
    %p33 = scmp.eq.s32.totalorder %s16, 1
    %p34 = por %p32, %p33
    %p35 = scmp.ne.s32.totalorder %s24, %s25
    %p36 = scmp.eq.s32.totalorder %s16, 0
    %p37 = por %p35, %p36
    %p38 = scmp.ne.s32.totalorder %s24, %s25
    %p39 = scmp.eq.s32.totalorder %s17, 1
    %p40 = por %p38, %p39
    %p42 = scmp.ne.s32.totalorder %s25, %s41
    %p43 = scmp.eq.s32.totalorder %s17, 0
    %p44 = por %p42, %p43
    %s46 = sadd.s32 %s45, 1
    %p49 = scmp.eq.s32.totalorder %s11, 1
    %p50 = scmp.ne.s32.totalorder %s45, %s47
    %p51 = scmp.eq.s32.totalorder %s11, 0
    %p52 = por %p50, %p51
    %p53 = scmp.ne.s32.totalorder %s45, %s47
    %p54 = scmp.eq.s32.totalorder %s16, 1
    %p55 = por %p53, %p54
    %p56 = scmp.ne.s32.totalorder %s47, %s48
    %p57 = scmp.eq.s32.totalorder %s16, 0
    %p58 = por %p56, %p57
    %p59 = scmp.ne.s32.totalorder %s47, %s48
    %p60 = scmp.eq.s32.totalorder %s17, 1
    %p61 = por %p59, %p60
    %p63 = scmp.ne.s32.totalorder %s48, %s62
    %p64 = scmp.eq.s32.totalorder %s17, 0
    %p65 = por %p63, %p64
    %s67 = sadd.s32 %s66, 1
    %p70 = scmp.eq.s32.totalorder %s11, 1
    %p71 = scmp.ne.s32.totalorder %s66, %s68
    %p72 = scmp.eq.s32.totalorder %s11, 0
    %p73 = por %p71, %p72
    %p74 = scmp.ne.s32.totalorder %s66, %s68
    %p75 = scmp.eq.s32.totalorder %s16, 1
    %p76 = por %p74, %p75
    %p77 = scmp.ne.s32.totalorder %s68, %s69
    %p78 = scmp.eq.s32.totalorder %s16, 0
    %p79 = por %p77, %p78
    %p80 = scmp.ne.s32.totalorder %s68, %s69
    %p81 = scmp.eq.s32.totalorder %s17, 1
    %p82 = por %p80, %p81
    %p84 = scmp.ne.s32.totalorder %s69, %s83
    %p85 = scmp.eq.s32.totalorder %s17, 0
    %p86 = por %p84, %p85
    %s87 = ssub.s32 %s11, %s18
    %p88 = scmp.eq.s32.totalorder %s87, 0
    %s90 = sadd.s32 %s89, 1
    %s91 = scalar_select %p88, %s89, %s90
    %p94 = pneg %p88
    %p95 = scmp.eq.s32.totalorder %s11, 1
    %p96 = por %p94, %p95
    %p97 = scmp.ne.s32.totalorder %s89, %s92
    %p98 = scmp.eq.s32.totalorder %s11, 0
    %p99 = por %p97, %p98
    %p100 = scmp.ne.s32.totalorder %s89, %s92
    %p101 = scmp.eq.s32.totalorder %s16, 1
    %p102 = por %p100, %p101
    %p103 = scmp.ne.s32.totalorder %s92, %s93
    %p104 = scmp.eq.s32.totalorder %s16, 0
    %p105 = por %p103, %p104
    %p106 = scmp.ne.s32.totalorder %s92, %s93
    %p107 = scmp.eq.s32.totalorder %s17, 1
    %p108 = por %p106, %p107
    %p110 = scmp.ne.s32.totalorder %s93, %s109
    %p111 = scmp.eq.s32.totalorder %s17, 0
    %p112 = por %p110, %p111
    %s113 = ssub.s32 %s11, %s18
    %p114 = scmp.eq.s32.totalorder %s113, 0
    %s116 = sadd.s32 %s115, 1
    %s117 = scalar_select %p114, %s115, %s116
    %p120 = pneg %p114
    %p121 = scmp.eq.s32.totalorder %s11, 1
    %p122 = por %p120, %p121
    %p123 = scmp.ne.s32.totalorder %s115, %s118
    %p124 = scmp.eq.s32.totalorder %s11, 0
    %p125 = por %p123, %p124
    %p126 = scmp.ne.s32.totalorder %s115, %s118
    %p127 = scmp.eq.s32.totalorder %s16, 1
    %p128 = por %p126, %p127
    %p129 = scmp.ne.s32.totalorder %s118, %s119
    %p130 = scmp.eq.s32.totalorder %s16, 0
    %p131 = por %p129, %p130
    %p132 = scmp.ne.s32.totalorder %s118, %s119
    %p133 = scmp.eq.s32.totalorder %s17, 1
    %p134 = por %p132, %p133
    %p136 = scmp.ne.s32.totalorder %s119, %s135
    %p137 = scmp.eq.s32.totalorder %s17, 0
    %p138 = por %p136, %p137
    %p139 = scmp.le.s32.totalorder 1, %s11
    %p140 = scmp.lt.s32.totalorder %s11, 3
    %p141 = pnand %p139, %p140
    %p142 = pneg %p141
    // Predicated region
    $region9: #{unet_innermost_block.3} parent=5 // pred_check
      _
    $region10: #{unet_innermost_block.3} parent=5 // pred_check_branch
      %144 = sbr.rel (%p141) target = $region12
    $region11: #{unet_innermost_block.3} parent=5 // pred_region
      %s145 = ssub.s32 %s11, 1
      // Predicated region
      $region13: #{unet_innermost_block.3} parent=11 // pred_check
        %p146 = pneg %p58
      $region14: #{unet_innermost_block.3} parent=11 // pred_check_branch
        %148 = sbr.rel (%p146) target = $region16
      $region15: #{unet_innermost_block.3} parent=11 // pred_region
        _
      $region16: #{unet_innermost_block.3} parent=11 // pred_fallthru
        _
      // Predicated region
      $region17: #{unet_innermost_block.3} parent=11 // pred_check
        %p149 = pneg %p79
      $region18: #{unet_innermost_block.3} parent=11 // pred_check_branch
        %151 = sbr.rel (%p149) target = $region20
      $region19: #{unet_innermost_block.3} parent=11 // pred_region
        _
      $region20: #{unet_innermost_block.3} parent=11 // pred_fallthru
        _
    $region12: #{unet_innermost_block.3} parent=5 // pred_fallthru
      _
    %p152 = scmp.lt.s32.totalorder %s11, 2
    // Predicated region
    $region21: #{unet_innermost_block.3} parent=5 // pred_check
      %p153 = pneg %p152
    $region22: #{unet_innermost_block.3} parent=5 // pred_check_branch
      %155 = sbr.rel (%p153) target = $region24
    $region23: #{unet_innermost_block.3} parent=5 // pred_region
      // Predicated region
      $region25: #{unet_innermost_block.3} parent=23 // pred_check
        %p156 = pneg %p31
      $region26: #{unet_innermost_block.3} parent=23 // pred_check_branch
        %158 = sbr.rel (%p156) target = $region28
      $region27: #{unet_innermost_block.3} parent=23 // pred_region
        %p159 = scmp.lt.s32.totalorder %s11, 1
        %s160 = scalar_select %p159, %s11, 1
        %s161 = smul.addr %s160, 2
        %s162 = smul.addr %s161, 4
        %s163 = scalar_lea.vmem %s0, %s162
      $region28: #{unet_innermost_block.3} parent=23 // pred_fallthru
        _
    $region24: #{unet_innermost_block.3} parent=5 // pred_fallthru
      _
    %p164 = scmp.le.s32.totalorder 1, %s11
    %p165 = scmp.lt.s32.totalorder %s11, 3
    %p166 = pnand %p164, %p165
    %p167 = pneg %p166
    // Predicated region
    $region29: #{unet_innermost_block.3} parent=5 // pred_check
      _
    $region30: #{unet_innermost_block.3} parent=5 // pred_check_branch
      %169 = sbr.rel (%p166) target = $region32
    $region31: #{unet_innermost_block.3} parent=5 // pred_region
      %s170 = ssub.s32 %s11, 1
      %p171 = scmp.lt.s32.totalorder %s16, 1
      %s172 = scalar_select %p171, %s16, 1
      %s173 = smul.addr %s172, 2
      %s174 = smul.addr %s173, 4
      %s175 = scalar_lea.vmem %s0, %s174
      %p176 = pneg %p37
      %p177 = pneg %p34
      %p178 = pneg %p58
      %p179 = pneg %p55
      %p180 = pneg %p79
      %p181 = pneg %p76
      %p182 = pneg %p105
      %p183 = pneg %p102
      %p184 = scmp.lt.s32.totalorder %s16, 1
      %s185 = scalar_select %p184, %s16, 1
      %s186 = smul.addr %s185, 4
      %s187 = smul.addr %s186, 4
      %s188 = scalar_lea.vmem %s3, %s187
      %p189 = pneg %p131
      %p190 = pneg %p128
      %p191 = scmp.lt.s32.totalorder %s16, 1
      %s192 = scalar_select %p191, %s16, 1
      %s193 = smul.addr %s192, 4
      %s194 = scalar_lea.vmem %s4, %s193
      %p195 = scmp.lt.s32.totalorder %s16, 1
      %s196 = scalar_select %p195, %s16, 1
      %s197 = smul.addr %s196, 2
      %s198 = smul.addr %s197, 4
      %s199 = scalar_lea.vmem %s0, %s198
      %p200 = scmp.lt.s32.totalorder %s16, 1
      %s201 = scalar_select %p200, %s16, 1
      %s202 = smul.addr %s201, 4
      %s203 = smul.addr %s202, 4
      %s204 = scalar_lea.vmem %s3, %s203
      %p205 = scmp.lt.s32.totalorder %s16, 1
      %s206 = scalar_select %p205, %s16, 1
      %s207 = smul.addr %s206, 4
      %s208 = scalar_lea.vmem %s4, %s207
      %v210 = vld [vmem:[%s199] sm:$0xf]
      %v211 = vld [vmem:[%s199 + $0x4] sm:$0xf]
      %v212 = vld [vmem:[%s2] sm:$0x1]
      %v213 = vld [vmem:[%s1] sm:$0x3]
      %s214 = scalar_lea.vmem %s1, 2
      %v215 = vld [vmem:[%s214] sm:$0x3]
      %v218 = vunpack.c.l.b16 %v210
      %v219 = vunpack.c.l.b16 %v211
      %v220 = vpack.c.b16 %v219, %v218
      %221 = vrot.lane.b32.xlu0 %v220, 127
      %v222 = vpop.permute.xlu0 %221
      %vm224 = vcmask 130048
      %v226 = vsel %vm224, %v215, 0
      %228 = vmatpush.bf16.msra.mxu0 0
      %229 = vmatpush.bf16.msra.mxu0 0
      %230 = vmatpush.bf16.msra.mxu0 0
      %231 = vmatpush.bf16.msra.mxu0 0
      %232 = vmatpush.bf16.msra.mxu0 0
      %233 = vmatpush.bf16.msra.mxu0 0
      %234 = vmatpush.bf16.msra.mxu0 0
      %235 = vmatpush.bf16.msra.mxu0 %v222
      %236 = vmatmul.bf16.gmra.mxu0 %v226
      %v237 = vpop.f32.mrf.mxu0
      %v238 = vadd.f32 0.0, %v237
      %v239 = vpop.f32.mrf.mxu0
      %240 = vdwg.mxu0
      %v243 = vsel %vm224, %v213, 0
      %245 = vmatpush.bf16.msra.mxu0 0
      %246 = vmatpush.bf16.msra.mxu0 0
      %247 = vmatpush.bf16.msra.mxu0 0
      %248 = vmatpush.bf16.msra.mxu0 0
      %249 = vmatpush.bf16.msra.mxu0 0
      %250 = vmatpush.bf16.msra.mxu0 0
      %251 = vmatpush.bf16.msra.mxu0 0
      %252 = vmatpush.bf16.msra.mxu0 %v220
      %253 = vmatmul.bf16.gmra.mxu0 %v243
      %v254 = vpop.f32.mrf.mxu0
      %v255 = vadd.f32 %v238, %v254
      %v256 = vpop.f32.mrf.mxu0
      %257 = vdwg.mxu0
      %s258 = scalar_lea.vmem %s1, 4
      %v259 = vld [vmem:[%s258] sm:$0x3]
      %260 = vrot.lane.b32.xlu0 %v220, 118
      %v261 = vpop.permute.xlu0 %260
      %v264 = vsel %vm224, %v259, 0
      %266 = vmatpush.bf16.msra.mxu0 0
      %267 = vmatpush.bf16.msra.mxu0 0
      %268 = vmatpush.bf16.msra.mxu0 0
      %269 = vmatpush.bf16.msra.mxu0 0
      %270 = vmatpush.bf16.msra.mxu0 0
      %271 = vmatpush.bf16.msra.mxu0 0
      %272 = vmatpush.bf16.msra.mxu0 0
      %273 = vmatpush.bf16.msra.mxu0 %v261
      %274 = vmatmul.bf16.gmra.mxu0 %v264
      %v275 = vpop.f32.mrf.mxu0
      %v276 = vadd.f32 0.0, %v275
      %v277 = vpop.f32.mrf.mxu0
      %278 = vdwg.mxu0
      %v279 = vadd.f32 %v255, %v276
      %s280 = scalar_lea.vmem %s1, 6
      %v281 = vld [vmem:[%s280] sm:$0x3]
      %282 = vrot.lane.b32.xlu0 %v220, 117
      %v283 = vpop.permute.xlu0 %282
      %v286 = vsel %vm224, %v281, 0
      %288 = vmatpush.bf16.msra.mxu0 0
      %289 = vmatpush.bf16.msra.mxu0 0
      %290 = vmatpush.bf16.msra.mxu0 0
      %291 = vmatpush.bf16.msra.mxu0 0
      %292 = vmatpush.bf16.msra.mxu0 0
      %293 = vmatpush.bf16.msra.mxu0 0
      %294 = vmatpush.bf16.msra.mxu0 0
      %295 = vmatpush.bf16.msra.mxu0 %v283
      %296 = vmatmul.bf16.gmra.mxu0 %v286
      %v297 = vpop.f32.mrf.mxu0
      %v298 = vadd.f32 0.0, %v297
      %v299 = vpop.f32.mrf.mxu0
      %300 = vdwg.mxu0
      %v301 = vadd.f32 %v279, %v298
      %v303 = vperm.slane %v212, 0
      %v305 = vmul.f32 %v301, %v303
      %vm306 = vcmask 650240
      %307 = vst.msk [vmem:[%s204] sm:$0xf] %vm306, %v305
      %v308 = vsel %vm306, %v305, 0.0
      %309 = vadd.xlane.f32.xlu0 %v308
      %v310 = vpop.xlane.xlu0 %309
      %v311 = vadd.f32 %v310, 0.0
      %v312 = vmul.f32 %v305, %v305
      %v313 = vsel %vm306, %v312, 0.0
      %314 = vadd.xlane.f32.xlu0 %v313
      %v315 = vpop.xlane.xlu0 %314
      %v316 = vadd.f32 %v315, 0.0
      %s317 = scalar_lea.vmem %s1, 8
      %v318 = vld [vmem:[%s317] sm:$0x3]
      %s319 = scalar_lea.vmem %s1, 10
      %v320 = vld [vmem:[%s319] sm:$0x3]
      %321 = vrot.lane.b32.xlu0 %v220, 126
      %v322 = vpop.permute.xlu0 %321
      %v325 = vsel %vm224, %v320, 0
      %327 = vmatpush.bf16.msra.mxu0 0
      %328 = vmatpush.bf16.msra.mxu0 0
      %329 = vmatpush.bf16.msra.mxu0 0
      %330 = vmatpush.bf16.msra.mxu0 0
      %331 = vmatpush.bf16.msra.mxu0 0
      %332 = vmatpush.bf16.msra.mxu0 0
      %333 = vmatpush.bf16.msra.mxu0 0
      %334 = vmatpush.bf16.msra.mxu0 %v322
      %335 = vmatmul.bf16.gmra.mxu0 %v325
      %v336 = vpop.f32.mrf.mxu0
      %v337 = vadd.f32 0.0, %v336
      %v338 = vpop.f32.mrf.mxu0
      %339 = vdwg.mxu0
      %v341 = vsel %vm224, %v318, 0
      %343 = vmatpush.bf16.msra.mxu0 0
      %344 = vmatpush.bf16.msra.mxu0 0
      %345 = vmatpush.bf16.msra.mxu0 0
      %346 = vmatpush.bf16.msra.mxu0 0
      %347 = vmatpush.bf16.msra.mxu0 0
      %348 = vmatpush.bf16.msra.mxu0 0
      %349 = vmatpush.bf16.msra.mxu0 0
      %350 = vmatpush.bf16.msra.mxu0 %v222
      %351 = vmatmul.bf16.gmra.mxu0 %v341
      %v352 = vpop.f32.mrf.mxu0
      %v353 = vadd.f32 %v337, %v352
      %v354 = vpop.f32.mrf.mxu0
      %355 = vdwg.mxu0
      %s356 = scalar_lea.vmem %s1, 12
      %v357 = vld [vmem:[%s356] sm:$0x3]
      %v359 = vsel %vm224, %v357, 0
      %361 = vmatpush.bf16.msra.mxu0 0
      %362 = vmatpush.bf16.msra.mxu0 0
      %363 = vmatpush.bf16.msra.mxu0 0
      %364 = vmatpush.bf16.msra.mxu0 0
      %365 = vmatpush.bf16.msra.mxu0 0
      %366 = vmatpush.bf16.msra.mxu0 0
      %367 = vmatpush.bf16.msra.mxu0 0
      %368 = vmatpush.bf16.msra.mxu0 %v283
      %369 = vmatmul.bf16.gmra.mxu0 %v359
      %v370 = vpop.f32.mrf.mxu0
      %v371 = vadd.f32 0.0, %v370
      %v372 = vpop.f32.mrf.mxu0
      %373 = vdwg.mxu0
      %v374 = vadd.f32 %v353, %v371
      %s375 = scalar_lea.vmem %s1, 14
      %v376 = vld [vmem:[%s375] sm:$0x3]
      %377 = vrot.lane.b32.xlu0 %v220, 116
      %v378 = vpop.permute.xlu0 %377
      %v381 = vsel %vm224, %v376, 0
      %383 = vmatpush.bf16.msra.mxu0 0
      %384 = vmatpush.bf16.msra.mxu0 0
      %385 = vmatpush.bf16.msra.mxu0 0
      %386 = vmatpush.bf16.msra.mxu0 0
      %387 = vmatpush.bf16.msra.mxu0 0
      %388 = vmatpush.bf16.msra.mxu0 0
      %389 = vmatpush.bf16.msra.mxu0 0
      %390 = vmatpush.bf16.msra.mxu0 %v378
      %391 = vmatmul.bf16.gmra.mxu0 %v381
      %v392 = vpop.f32.mrf.mxu0
      %v393 = vadd.f32 0.0, %v392
      %v394 = vpop.f32.mrf.mxu0
      %395 = vdwg.mxu0
      %v396 = vadd.f32 %v374, %v393
      %v397 = vmul.f32 %v396, %v303
      %s398 = scalar_lea.vmem %s204, 4
      %399 = vst.msk [vmem:[%s398] sm:$0xf] %vm306, %v397
      %v400 = vsel %vm306, %v397, 0.0
      %401 = vadd.xlane.f32.xlu0 %v400
      %v402 = vpop.xlane.xlu0 %401
      %v403 = vadd.f32 %v311, %v402
      %v404 = vmul.f32 %v397, %v397
      %v405 = vsel %vm306, %v404, 0.0
      %406 = vadd.xlane.f32.xlu0 %v405
      %v407 = vpop.xlane.xlu0 %406
      %v408 = vadd.f32 %v316, %v407
      %s409 = scalar_lea.vmem %s1, 16
      %v410 = vld [vmem:[%s409] sm:$0x3]
      %s411 = scalar_lea.vmem %s1, 18
      %v412 = vld [vmem:[%s411] sm:$0x3]
      %v414 = vsel %vm224, %v412, 0
      %416 = vmatpush.bf16.msra.mxu0 0
      %417 = vmatpush.bf16.msra.mxu0 0
      %418 = vmatpush.bf16.msra.mxu0 0
      %419 = vmatpush.bf16.msra.mxu0 0
      %420 = vmatpush.bf16.msra.mxu0 0
      %421 = vmatpush.bf16.msra.mxu0 0
      %422 = vmatpush.bf16.msra.mxu0 0
      %423 = vmatpush.bf16.msra.mxu0 %v283
      %424 = vmatmul.bf16.gmra.mxu0 %v414
      %v425 = vpop.f32.mrf.mxu0
      %v426 = vadd.f32 0.0, %v425
      %v427 = vpop.f32.mrf.mxu0
      %428 = vdwg.mxu0
      %v430 = vsel %vm224, %v410, 0
      %432 = vmatpush.bf16.msra.mxu0 0
      %433 = vmatpush.bf16.msra.mxu0 0
      %434 = vmatpush.bf16.msra.mxu0 0
      %435 = vmatpush.bf16.msra.mxu0 0
      %436 = vmatpush.bf16.msra.mxu0 0
      %437 = vmatpush.bf16.msra.mxu0 0
      %438 = vmatpush.bf16.msra.mxu0 0
      %439 = vmatpush.bf16.msra.mxu0 %v261
      %440 = vmatmul.bf16.gmra.mxu0 %v430
      %v441 = vpop.f32.mrf.mxu0
      %v442 = vadd.f32 %v426, %v441
      %v443 = vpop.f32.mrf.mxu0
      %444 = vdwg.mxu0
      %s445 = scalar_lea.vmem %s1, 20
      %v446 = vld [vmem:[%s445] sm:$0x3]
      %447 = vrot.lane.b32.xlu0 %v220, 108
      %v448 = vpop.permute.xlu0 %447
      %v451 = vsel %vm224, %v446, 0
      %453 = vmatpush.bf16.msra.mxu0 0
      %454 = vmatpush.bf16.msra.mxu0 0
      %455 = vmatpush.bf16.msra.mxu0 0
      %456 = vmatpush.bf16.msra.mxu0 0
      %457 = vmatpush.bf16.msra.mxu0 0
      %458 = vmatpush.bf16.msra.mxu0 0
      %459 = vmatpush.bf16.msra.mxu0 0
      %460 = vmatpush.bf16.msra.mxu0 %v448
      %461 = vmatmul.bf16.gmra.mxu0 %v451
      %v462 = vpop.f32.mrf.mxu0
      %v463 = vadd.f32 0.0, %v462
      %v464 = vpop.f32.mrf.mxu0
      %465 = vdwg.mxu0
      %v466 = vadd.f32 %v442, %v463
      %s467 = scalar_lea.vmem %s1, 22
      %v468 = vld [vmem:[%s467] sm:$0x3]
      %469 = vrot.lane.b32.xlu0 %v220, 107
      %v470 = vpop.permute.xlu0 %469
      %v473 = vsel %vm224, %v468, 0
      %475 = vmatpush.bf16.msra.mxu0 0
      %476 = vmatpush.bf16.msra.mxu0 0
      %477 = vmatpush.bf16.msra.mxu0 0
      %478 = vmatpush.bf16.msra.mxu0 0
      %479 = vmatpush.bf16.msra.mxu0 0
      %480 = vmatpush.bf16.msra.mxu0 0
      %481 = vmatpush.bf16.msra.mxu0 0
      %482 = vmatpush.bf16.msra.mxu0 %v470
      %483 = vmatmul.bf16.gmra.mxu0 %v473
      %v484 = vpop.f32.mrf.mxu0
      %v485 = vadd.f32 0.0, %v484
      %v486 = vpop.f32.mrf.mxu0
      %487 = vdwg.mxu0
      %v488 = vadd.f32 %v466, %v485
      %v489 = vmul.f32 %v488, %v303
      %s490 = scalar_lea.vmem %s204, 8
      %491 = vst.msk [vmem:[%s490] sm:$0xf] %vm306, %v489
      %v492 = vsel %vm306, %v489, 0.0
      %493 = vadd.xlane.f32.xlu0 %v492
      %v494 = vpop.xlane.xlu0 %493
      %v495 = vadd.f32 %v403, %v494
      %v496 = vmul.f32 %v489, %v489
      %v497 = vsel %vm306, %v496, 0.0
      %498 = vadd.xlane.f32.xlu0 %v497
      %v499 = vpop.xlane.xlu0 %498
      %v500 = vadd.f32 %v408, %v499
      %s501 = scalar_lea.vmem %s1, 24
      %v502 = vld [vmem:[%s501] sm:$0x3]
      %s503 = scalar_lea.vmem %s1, 26
      %v504 = vld [vmem:[%s503] sm:$0x3]
      %v506 = vsel %vm224, %v504, 0
      %508 = vmatpush.bf16.msra.mxu0 0
      %509 = vmatpush.bf16.msra.mxu0 0
      %510 = vmatpush.bf16.msra.mxu0 0
      %511 = vmatpush.bf16.msra.mxu0 0
      %512 = vmatpush.bf16.msra.mxu0 0
      %513 = vmatpush.bf16.msra.mxu0 0
      %514 = vmatpush.bf16.msra.mxu0 0
      %515 = vmatpush.bf16.msra.mxu0 %v378
      %516 = vmatmul.bf16.gmra.mxu0 %v506
      %v517 = vpop.f32.mrf.mxu0
      %v518 = vadd.f32 0.0, %v517
      %v519 = vpop.f32.mrf.mxu0
      %520 = vdwg.mxu0
      %v522 = vsel %vm224, %v502, 0
      %524 = vmatpush.bf16.msra.mxu0 0
      %525 = vmatpush.bf16.msra.mxu0 0
      %526 = vmatpush.bf16.msra.mxu0 0
      %527 = vmatpush.bf16.msra.mxu0 0
      %528 = vmatpush.bf16.msra.mxu0 0
      %529 = vmatpush.bf16.msra.mxu0 0
      %530 = vmatpush.bf16.msra.mxu0 0
      %531 = vmatpush.bf16.msra.mxu0 %v283
      %532 = vmatmul.bf16.gmra.mxu0 %v522
      %v533 = vpop.f32.mrf.mxu0
      %v534 = vadd.f32 %v518, %v533
      %v535 = vpop.f32.mrf.mxu0
      %536 = vdwg.mxu0
      %s537 = scalar_lea.vmem %s1, 28
      %v538 = vld [vmem:[%s537] sm:$0x3]
      %v540 = vsel %vm224, %v538, 0
      %542 = vmatpush.bf16.msra.mxu0 0
      %543 = vmatpush.bf16.msra.mxu0 0
      %544 = vmatpush.bf16.msra.mxu0 0
      %545 = vmatpush.bf16.msra.mxu0 0
      %546 = vmatpush.bf16.msra.mxu0 0
      %547 = vmatpush.bf16.msra.mxu0 0
      %548 = vmatpush.bf16.msra.mxu0 0
      %549 = vmatpush.bf16.msra.mxu0 %v470
      %550 = vmatmul.bf16.gmra.mxu0 %v540
      %v551 = vpop.f32.mrf.mxu0
      %v552 = vadd.f32 0.0, %v551
      %v553 = vpop.f32.mrf.mxu0
      %554 = vdwg.mxu0
      %v555 = vadd.f32 %v534, %v552
      %s556 = scalar_lea.vmem %s1, 30
      %v557 = vld [vmem:[%s556] sm:$0x3]
      %558 = vrot.lane.b32.xlu0 %v220, 106
      %v559 = vpop.permute.xlu0 %558
      %v562 = vsel %vm224, %v557, 0
      %564 = vmatpush.bf16.msra.mxu0 0
      %565 = vmatpush.bf16.msra.mxu0 0
      %566 = vmatpush.bf16.msra.mxu0 0
      %567 = vmatpush.bf16.msra.mxu0 0
      %568 = vmatpush.bf16.msra.mxu0 0
      %569 = vmatpush.bf16.msra.mxu0 0
      %570 = vmatpush.bf16.msra.mxu0 0
      %571 = vmatpush.bf16.msra.mxu0 %v559
      %572 = vmatmul.bf16.gmra.mxu0 %v562
      %v573 = vpop.f32.mrf.mxu0
      %v574 = vadd.f32 0.0, %v573
      %v575 = vpop.f32.mrf.mxu0
      %576 = vdwg.mxu0
      %v577 = vadd.f32 %v555, %v574
      %v578 = vmul.f32 %v577, %v303
      %s579 = scalar_lea.vmem %s204, 12
      %580 = vst.msk [vmem:[%s579] sm:$0xf] %vm306, %v578
      %v581 = vsel %vm306, %v578, 0.0
      %582 = vadd.xlane.f32.xlu0 %v581
      %v583 = vpop.xlane.xlu0 %582
      %v584 = vadd.f32 %v495, %v583
      %v585 = vmul.f32 %v578, %v578
      %v586 = vsel %vm306, %v585, 0.0
      %587 = vadd.xlane.f32.xlu0 %v586
      %v588 = vpop.xlane.xlu0 %587
      %v589 = vadd.f32 %v500, %v588
      %vm590 = vcmask 3072
      %591 = vst.msk [vmem:[%s208] sm:$0xf] %vm590, %v584
      %vm592 = vcmask 11272
      %593 = vst.msk [vmem:[%s208] sm:$0xf] %vm592, %v589
      %p594 = scmp.lt.s32.totalorder %s16, 1
      %s595 = scalar_select %p594, %s16, 1
      %s596 = smul.addr %s595, 4
      %s597 = smul.addr %s596, 4
      %s598 = scalar_lea.vmem %s3, %s597
      %p599 = scmp.lt.s32.totalorder %s16, 1
      %s600 = scalar_select %p599, %s16, 1
      %s601 = smul.addr %s600, 4
      %s602 = scalar_lea.vmem %s4, %s601
      // Predicated region
      $region33: #{unet_innermost_block.3} parent=31 // pred_check
        %p603 = pneg %p102
      $region34: #{unet_innermost_block.3} parent=31 // pred_check_branch
        %605 = sbr.rel (%p603) target = $region36
      $region35: #{unet_innermost_block.3} parent=31 // pred_region
        _
      $region36: #{unet_innermost_block.3} parent=31 // pred_fallthru
        _
      // Predicated region
      $region37: #{unet_innermost_block.3} parent=31 // pred_check
        %p606 = pneg %p128
      $region38: #{unet_innermost_block.3} parent=31 // pred_check_branch
        %608 = sbr.rel (%p606) target = $region40
      $region39: #{unet_innermost_block.3} parent=31 // pred_region
        _
      $region40: #{unet_innermost_block.3} parent=31 // pred_fallthru
        _
    $region32: #{unet_innermost_block.3} parent=5 // pred_fallthru
      _
    %p609 = scmp.le.s32.totalorder 2, %s11
    // Predicated region
    $region41: #{unet_innermost_block.3} parent=5 // pred_check
      %p610 = pneg %p609
    $region42: #{unet_innermost_block.3} parent=5 // pred_check_branch
      %612 = sbr.rel (%p610) target = $region44
    $region43: #{unet_innermost_block.3} parent=5 // pred_region
      %s613 = ssub.s32 %s11, 2
      // Predicated region
      $region45: #{unet_innermost_block.3} parent=43 // pred_check
        %p614 = pneg %p108
      $region46: #{unet_innermost_block.3} parent=43 // pred_check_branch
        %616 = sbr.rel (%p614) target = $region48
      $region47: #{unet_innermost_block.3} parent=43 // pred_region
        %p617 = scmp.lt.s32.totalorder %s17, 1
        %s618 = scalar_select %p617, %s17, 1
        %s619 = smul.addr %s618, 4
        %s620 = smul.addr %s619, 4
        %s621 = scalar_lea.vmem %s3, %s620
      $region48: #{unet_innermost_block.3} parent=43 // pred_fallthru
        _
      // Predicated region
      $region49: #{unet_innermost_block.3} parent=43 // pred_check
        %p622 = pneg %p134
      $region50: #{unet_innermost_block.3} parent=43 // pred_check_branch
        %624 = sbr.rel (%p622) target = $region52
      $region51: #{unet_innermost_block.3} parent=43 // pred_region
        %p625 = scmp.lt.s32.totalorder %s17, 1
        %s626 = scalar_select %p625, %s17, 1
        %s627 = smul.addr %s626, 4
        %s628 = scalar_lea.vmem %s4, %s627
      $region52: #{unet_innermost_block.3} parent=43 // pred_fallthru
        _
    $region44: #{unet_innermost_block.3} parent=5 // pred_fallthru
      _
  $region6: #{unet_innermost_block.3} parent=0 // loop_footer
    %s15 = sadd.s32 1, %s11
  $region7: #{unet_innermost_block.3} parent=0 // loop_footer_branch
    %10 = sbr.rel target = $region3
  $region8: #{unet_innermost_block.3} parent=0 // loop_exit
    _

</llo_original>
